<compile_context>
chip_gen: v7x
topology: tpu7x:2x2x1
jax: 0.10.0
libtpu: 0.0.40
codegen_flags: <defaults>
</compile_context>

<pallas_src>
import functools

import jax
import jax.numpy as jnp
from jax.experimental import pallas as pl
from jax.experimental.pallas import tpu as pltpu


def _round_up(x, m):
    return (x + m - 1) // m * m


def gcn_kernel(mask_ref, a_ref, x_ref, w1_ref, b1_ref, w2_ref, b2_ref,
               out_ref, acc_ref):
    i = pl.program_id(0)        # node-row tile
    k = pl.program_id(1)        # reduction tile (cols of A / rows of X)

    @pl.when(k == 0)
    def _init():
        acc_ref[...] = jnp.zeros_like(acc_ref)

    # Skip MXU work for all-zero adjacency tiles (real graphs are sparse).
    @pl.when(mask_ref[i, k] != 0)
    def _accumulate():
        acc_ref[...] += jnp.dot(a_ref[...], x_ref[...],
                                preferred_element_type=jnp.float32)

    @pl.when(k == pl.num_programs(1) - 1)
    def _finalize():
        # (A @ X) @ W1 + b1  ==  A @ (X @ W1) + b1, with fewer N^2 FLOPs.
        h = jnp.dot(acc_ref[...], w1_ref[...],
                    preferred_element_type=jnp.float32) + b1_ref[...]
        out = jnp.dot(h, w2_ref[...],
                      preferred_element_type=jnp.float32) + b2_ref[...]
        out_ref[...] = out.astype(out_ref.dtype)


@functools.partial(jax.jit, static_argnames=("tm", "tk"))
def gcn_forward(a_norm, x, w1, b1, w2, b2, *, tm=128, tk=128):
    N, F = x.shape
    H = w1.shape[1]
    C = w2.shape[1]

    LANE = 128
    Nm = _round_up(N, tm)          # padded rows of A / output rows
    Nk = _round_up(N, tk)          # padded cols of A / rows of X
    Fp = _round_up(F, LANE)
    Hp = _round_up(H, LANE)
    Cp = _round_up(C, LANE)
    nrt, nkt = Nm // tm, Nk // tk

    # Zero-pad; padded rows/cols are sliced away at the end (zero weights /
    # zero bias columns keep the padded lanes exactly zero).
    a_p = jnp.zeros((Nm, Nk), jnp.float32).at[:N, :N].set(a_norm)
    x_p = jnp.zeros((Nk, Fp), jnp.float32).at[:N, :F].set(x)
    w1_p = jnp.zeros((Fp, Hp), jnp.float32).at[:F, :H].set(w1)
    b1_p = jnp.zeros((1, Hp), jnp.float32).at[:, :H].set(b1)
    w2_p = jnp.zeros((Hp, Cp), jnp.float32).at[:H, :C].set(w2)
    b2_p = jnp.zeros((1, Cp), jnp.float32).at[:, :C].set(b2)

    # Per-tile nonzero mask of A (scalar-prefetched into SMEM).
    block_mask = jnp.any(
        a_p.reshape(nrt, tm, nkt, tk) != 0.0, axis=(1, 3)
    ).astype(jnp.int32)

    # bf16 MXU operands for the big N^2 propagation matmul (f32 accumulate).
    a_bf = a_p.astype(jnp.bfloat16)
    x_bf = x_p.astype(jnp.bfloat16)

    grid_spec = pltpu.PrefetchScalarGridSpec(
        num_scalar_prefetch=1,
        grid=(nrt, nkt),
        in_specs=[
            pl.BlockSpec((tm, tk), lambda i, k, m: (i, k)),   # A tile
            pl.BlockSpec((tk, Fp), lambda i, k, m: (k, 0)),   # X tile
            pl.BlockSpec((Fp, Hp), lambda i, k, m: (0, 0)),   # W1 (resident)
            pl.BlockSpec((1, Hp), lambda i, k, m: (0, 0)),    # b1
            pl.BlockSpec((Hp, Cp), lambda i, k, m: (0, 0)),   # W2
            pl.BlockSpec((1, Cp), lambda i, k, m: (0, 0)),    # b2
        ],
        out_specs=pl.BlockSpec((tm, Cp), lambda i, k, m: (i, 0)),
        scratch_shapes=[pltpu.VMEM((tm, Fp), jnp.float32)],   # A@X accumulator
    )

    out_p = pl.pallas_call(
        gcn_kernel,
        grid_spec=grid_spec,
        out_shape=jax.ShapeDtypeStruct((Nm, Cp), jnp.float32),
        compiler_params=pltpu.CompilerParams(
            dimension_semantics=("parallel", "arbitrary"),
            # NOTE: tile sizes / VMEM budget should be re-derived per
            # generation (v7x has 64 MiB physical VMEM vs 128 MiB on v5e/v6e).
            vmem_limit_bytes=64 * 1024 * 1024,
        ),
    )(block_mask, a_bf, x_bf, w1_p, b1_p, w2_p, b2_p)

    return out_p[:N, :C]


def build_normalized_adjacency(edge_index, num_nodes):
    """Dense D^{-1/2} (A + I) D^{-1/2}, matching PyG gcn_norm semantics."""
    src, dst = edge_index[0], edge_index[1]
    a = jnp.zeros((num_nodes, num_nodes), jnp.float32)
    a = a.at[dst, src].add(1.0)                      # edge weights = 1.0
    a = a + jnp.eye(num_nodes, dtype=jnp.float32)    # add self loops
    deg = a.sum(axis=1)
    dinv = jnp.where(deg > 0, jax.lax.rsqrt(deg), 0.0)
    return dinv[:, None] * a * dinv[None, :]


def xavier_uniform(key, fan_in, fan_out):
    bound = (6.0 / (fan_in + fan_out)) ** 0.5
    return jax.random.uniform(
        key, (fan_in, fan_out), jnp.float32, minval=-bound, maxval=bound
    )


if __name__ == "__main__":
    # Small synthetic problem (big enough to exercise the tiled grid).
    N, NFEAT, NHID, NCLASS, NEDGES = 256, 16, 32, 8, 1024

    key = jax.random.PRNGKey(0)
    kx, ke, kw1, kw2 = jax.random.split(key, 4)

    x = jax.random.normal(kx, (N, NFEAT), jnp.float32)
    edge_index = jax.random.randint(ke, (2, NEDGES), 0, N, jnp.int32)

    # Deterministic parameter init (glorot weights, zero biases), matching
    # GCNConv(nfeat, nhid) and nn.Linear(nhid, nclass).
    w1 = xavier_uniform(kw1, NFEAT, NHID)          # GCNConv weight (x @ W1)
    b1 = jnp.zeros((1, NHID), jnp.float32)         # GCNConv bias
    w2 = xavier_uniform(kw2, NHID, NCLASS)         # fc weight (h @ W2)
    b2 = jnp.zeros((1, NCLASS), jnp.float32)       # fc bias

    a_norm = build_normalized_adjacency(edge_index, N)

    out = gcn_forward(a_norm, x, w1, b1, w2, b2, tm=128, tk=128)
    out = jax.block_until_ready(out)
    assert out.shape == (N, NCLASS)

    # Reference consistent with the kernel's bf16 MXU operands (tight check).
    a_r = a_norm.astype(jnp.bfloat16).astype(jnp.float32)
    x_r = x.astype(jnp.bfloat16).astype(jnp.float32)
    ref_bf16 = ((a_r @ x_r) @ w1 + b1) @ w2 + b2
    assert jnp.allclose(out, ref_bf16, atol=1e-3, rtol=1e-3)

    # Full-f32 PyTorch-semantics reference (loose check for bf16 rounding).
    ref_f32 = (a_norm @ (x @ w1) + b1) @ w2 + b2
    assert jnp.allclose(out, ref_f32, atol=1e-2, rtol=1e-2)

    print("KERNEL_OK")
</pallas_src>

<mosaic_0001>
module attributes {stable_mosaic.version = 11 : i64} {
  func.func @gcn_kernel(%arg0: i32, %arg1: i32, %arg2: memref<2x2xi32, #tpu.memory_space<smem>>, %arg3: memref<128x128xbf16, #tpu.memory_space<vmem>>, %arg4: memref<128x128xbf16, #tpu.memory_space<vmem>>, %arg5: memref<128x128xf32, #tpu.memory_space<vmem>>, %arg6: memref<1x128xf32, #tpu.memory_space<vmem>>, %arg7: memref<128x128xf32, #tpu.memory_space<vmem>>, %arg8: memref<1x128xf32, #tpu.memory_space<vmem>>, %arg9: memref<128x128xf32, #tpu.memory_space<vmem>>, %arg10: memref<128x128xf32, #tpu.memory_space<vmem>>) attributes {dimension_semantics = [#tpu.dimension_semantics<parallel>, #tpu.dimension_semantics<arbitrary>], iteration_bounds = array<i64: 2, 2>, scalar_prefetch = 1 : i64, scratch_operands = 1 : i64, tpu.core_type = #tpu.core_type<tc>, window_params = [{transform_indices = @transform_0, window_bounds = array<i64: 128, 128>}, {transform_indices = @transform_1, window_bounds = array<i64: 128, 128>}, {pipeline_mode = #tpu.pipeline_mode<synchronous>, transform_indices = @transform_2, window_bounds = array<i64: 128, 128>}, {pipeline_mode = #tpu.pipeline_mode<synchronous>, transform_indices = @transform_3, window_bounds = array<i64: 1, 128>}, {pipeline_mode = #tpu.pipeline_mode<synchronous>, transform_indices = @transform_4, window_bounds = array<i64: 128, 128>}, {pipeline_mode = #tpu.pipeline_mode<synchronous>, transform_indices = @transform_5, window_bounds = array<i64: 1, 128>}, {transform_indices = @transform_6, window_bounds = array<i64: 128, 128>}]} {
    %c0_i32 = arith.constant 0 : i32
    %0 = arith.cmpi eq, %arg1, %c0_i32 : i32
    %1 = arith.extui %0 : i1 to i32
    %c0_i32_0 = arith.constant 0 : i32
    %2 = arith.cmpi ne, %1, %c0_i32_0 : i32
    scf.if %2 {
      %cst = arith.constant 0.000000e+00 : f32
      %12 = vector.broadcast %cst : f32 to vector<128x128xf32>
      %c0 = arith.constant 0 : index
      %c0_4 = arith.constant 0 : index
      %13 = vector.load %arg10[%c0, %c0_4] : memref<128x128xf32, #tpu.memory_space<vmem>>, vector<128x128xf32>
      tpu.vector_store %arg10[%c0, %c0_4], %12 {strides = array<i32>} : memref<128x128xf32, #tpu.memory_space<vmem>>, vector<128x128xf32>,
    } else {
    }
    %3 = arith.index_cast %arg0 : i32 to index
    %4 = arith.index_cast %arg1 : i32 to index
    %5 = memref.load %arg2[%3, %4] : memref<2x2xi32, #tpu.memory_space<smem>>
    %c0_i32_1 = arith.constant 0 : i32
    %6 = arith.cmpi ne, %5, %c0_i32_1 : i32
    %7 = arith.extui %6 : i1 to i32
    %c0_i32_2 = arith.constant 0 : i32
    %8 = arith.cmpi ne, %7, %c0_i32_2 : i32
    scf.if %8 {
      %c0 = arith.constant 0 : index
      %c0_4 = arith.constant 0 : index
      %12 = vector.load %arg10[%c0, %c0_4] : memref<128x128xf32, #tpu.memory_space<vmem>>, vector<128x128xf32>
      %c0_5 = arith.constant 0 : index
      %c0_6 = arith.constant 0 : index
      %13 = vector.load %arg3[%c0_5, %c0_6] : memref<128x128xbf16, #tpu.memory_space<vmem>>, vector<128x128xbf16>
      %c0_7 = arith.constant 0 : index
      %c0_8 = arith.constant 0 : index
      %14 = vector.load %arg4[%c0_7, %c0_8] : memref<128x128xbf16, #tpu.memory_space<vmem>>, vector<128x128xbf16>
      %cst = arith.constant dense<0.000000e+00> : vector<128x128xf32>
      %15 = tpu.matmul %13, %14, %cst {dimension_numbers = #tpu.dot_dimension_numbers<[1], [0], [0], [1], [0, 0, 1, 1], [], []>} : vector<128x128xbf16>, vector<128x128xbf16>, vector<128x128xf32> -> vector<128x128xf32>
      %16 = arith.addf %12, %15 : vector<128x128xf32>
      %c0_9 = arith.constant 0 : index
      %c0_10 = arith.constant 0 : index
      %17 = vector.load %arg10[%c0_9, %c0_10] : memref<128x128xf32, #tpu.memory_space<vmem>>, vector<128x128xf32>
      tpu.vector_store %arg10[%c0_9, %c0_10], %16 {strides = array<i32>} : memref<128x128xf32, #tpu.memory_space<vmem>>, vector<128x128xf32>,
    } else {
    }
    %c1_i32 = arith.constant 1 : i32
    %9 = arith.cmpi eq, %arg1, %c1_i32 : i32
    %10 = arith.extui %9 : i1 to i32
    %c0_i32_3 = arith.constant 0 : i32
    %11 = arith.cmpi ne, %10, %c0_i32_3 : i32
    scf.if %11 {
      %c0 = arith.constant 0 : index
      %c0_4 = arith.constant 0 : index
      %12 = vector.load %arg10[%c0, %c0_4] : memref<128x128xf32, #tpu.memory_space<vmem>>, vector<128x128xf32>
      %c0_5 = arith.constant 0 : index
      %c0_6 = arith.constant 0 : index
      %13 = vector.load %arg5[%c0_5, %c0_6] : memref<128x128xf32, #tpu.memory_space<vmem>>, vector<128x128xf32>
      %cst = arith.constant dense<0.000000e+00> : vector<128x128xf32>
      %14 = tpu.matmul %12, %13, %cst {dimension_numbers = #tpu.dot_dimension_numbers<[1], [0], [0], [1], [0, 0, 1, 1], [], []>} : vector<128x128xf32>, vector<128x128xf32>, vector<128x128xf32> -> vector<128x128xf32>
      %c0_7 = arith.constant 0 : index
      %c0_8 = arith.constant 0 : index
      %15 = vector.load %arg6[%c0_7, %c0_8] : memref<1x128xf32, #tpu.memory_space<vmem>>, vector<1x128xf32>
      %16 = vector.broadcast %15 : vector<1x128xf32> to vector<128x128xf32>
      %17 = arith.addf %14, %16 : vector<128x128xf32>
      %c0_9 = arith.constant 0 : index
      %c0_10 = arith.constant 0 : index
      %18 = vector.load %arg7[%c0_9, %c0_10] : memref<128x128xf32, #tpu.memory_space<vmem>>, vector<128x128xf32>
      %cst_11 = arith.constant dense<0.000000e+00> : vector<128x128xf32>
      %19 = tpu.matmul %17, %18, %cst_11 {dimension_numbers = #tpu.dot_dimension_numbers<[1], [0], [0], [1], [0, 0, 1, 1], [], []>} : vector<128x128xf32>, vector<128x128xf32>, vector<128x128xf32> -> vector<128x128xf32>
      %c0_12 = arith.constant 0 : index
      %c0_13 = arith.constant 0 : index
      %20 = vector.load %arg8[%c0_12, %c0_13] : memref<1x128xf32, #tpu.memory_space<vmem>>, vector<1x128xf32>
      %21 = vector.broadcast %20 : vector<1x128xf32> to vector<128x128xf32>
      %22 = arith.addf %19, %21 : vector<128x128xf32>
      %c0_14 = arith.constant 0 : index
      %c0_15 = arith.constant 0 : index
      %23 = vector.load %arg9[%c0_14, %c0_15] : memref<128x128xf32, #tpu.memory_space<vmem>>, vector<128x128xf32>
      tpu.vector_store %arg9[%c0_14, %c0_15], %22 {strides = array<i32>} : memref<128x128xf32, #tpu.memory_space<vmem>>, vector<128x128xf32>,
    } else {
    }
    return
  }
  func.func @transform_0(%arg0: i32, %arg1: i32, %arg2: memref<2x2xi32, #tpu.memory_space<smem>>) -> (i32, i32) {
    %c0_i32 = arith.constant 0 : i32
    return %arg0, %arg1 : i32, i32
  }
  func.func @transform_1(%arg0: i32, %arg1: i32, %arg2: memref<2x2xi32, #tpu.memory_space<smem>>) -> (i32, i32) {
    %c0_i32 = arith.constant 0 : i32
    %c0_i32_0 = arith.constant 0 : i32
    return %arg1, %c0_i32 : i32, i32
  }
  func.func @transform_2(%arg0: i32, %arg1: i32, %arg2: memref<2x2xi32, #tpu.memory_space<smem>>) -> (i32, i32) {
    %c0_i32 = arith.constant 0 : i32
    %c0_i32_0 = arith.constant 0 : i32
    %c0_i32_1 = arith.constant 0 : i32
    return %c0_i32, %c0_i32_0 : i32, i32
  }
  func.func @transform_3(%arg0: i32, %arg1: i32, %arg2: memref<2x2xi32, #tpu.memory_space<smem>>) -> (i32, i32) {
    %c0_i32 = arith.constant 0 : i32
    %c0_i32_0 = arith.constant 0 : i32
    %c0_i32_1 = arith.constant 0 : i32
    return %c0_i32, %c0_i32_0 : i32, i32
  }
  func.func @transform_4(%arg0: i32, %arg1: i32, %arg2: memref<2x2xi32, #tpu.memory_space<smem>>) -> (i32, i32) {
    %c0_i32 = arith.constant 0 : i32
    %c0_i32_0 = arith.constant 0 : i32
    %c0_i32_1 = arith.constant 0 : i32
    return %c0_i32, %c0_i32_0 : i32, i32
  }
  func.func @transform_5(%arg0: i32, %arg1: i32, %arg2: memref<2x2xi32, #tpu.memory_space<smem>>) -> (i32, i32) {
    %c0_i32 = arith.constant 0 : i32
    %c0_i32_0 = arith.constant 0 : i32
    %c0_i32_1 = arith.constant 0 : i32
    return %c0_i32, %c0_i32_0 : i32, i32
  }
  func.func @transform_6(%arg0: i32, %arg1: i32, %arg2: memref<2x2xi32, #tpu.memory_space<smem>>) -> (i32, i32) {
    %c0_i32 = arith.constant 0 : i32
    %c0_i32_0 = arith.constant 0 : i32
    return %arg0, %c0_i32 : i32, i32
  }
}

</mosaic_0001>

<llo_original>
// kernel: gcn_forward.1
$region0: #{gcn_forward.1}
  #allocation0 [shape = 'u32[]', space=smem, size = 0x4, offset = 0x4, fixed_abs, tag = 'smem constant byte address 0x4 - core index']
  #allocation1 [shape = 'u32[144,128]{1,0:T(1,128)}', space=vmem, size = 0x12000, scoped, tag = 'internal scratch']
  #allocation2 [shape = 'f32[128,128]{1,0:T(8,128)}', space=vmem, size = 0x10000, scoped, tag = 'scratch operand']
  #allocation3 [shape = 's32[1]{0}', space=sflag, size = 0x4, scoped, tag = 'scoped memory for gcn_forward.1']
  #allocation4 [shape = 'u8[1024]{0}', space=smem, size = 0x400, scoped, tag = 'prefetched SMEM operand 0']
  %s0 = inlined_call_operand.hbm [shape: s32[2,2], index: 0, kind: input, shape index: {}]
  %s1 = inlined_call_operand.hbm [shape: bf16[256,256], index: 1, kind: input, shape index: {}]
  %s2 = inlined_call_operand.hbm [shape: bf16[256,128], index: 2, kind: input, shape index: {}]
  %s3 = inlined_call_operand.hbm [shape: f32[128,128], index: 3, kind: input, shape index: {}]
  %s4 = inlined_call_operand.hbm [shape: f32[1,128], index: 4, kind: input, shape index: {}]
  %s5 = inlined_call_operand.hbm [shape: f32[128,128], index: 5, kind: input, shape index: {}]
  %s6 = inlined_call_operand.hbm [shape: f32[1,128], index: 6, kind: input, shape index: {}]
  %s7 = inlined_call_operand.hbm [shape: f32[256,128], index: 7, kind: output, shape index: {}]
  %s8 = sld [smem:[#allocation0]]
  $region93: #{gcn_forward.1} parent=0
    _
  %s10 = ssub.s32 1, %s8
  %s11 = scalar_select 0, %s10, %s8
  %13 = dma.hbm_to_smem %s0, 32, [#allocation4], [#allocation3]
  %14 = dma.done [#allocation3], 32
  %15 = sfence
  $region1: #{gcn_forward.1} parent=0
    #allocation5 [shape = 'u8[65536]{0}', space=vmem, size = 0x10000, scoped, tag = 'input window, operand 1']
    #allocation6 [shape = 's32[2]{0}', space=sflag, size = 0x8, scoped, tag = 'scoped memory for gcn_forward.1']
    #allocation7 [shape = 's32[2]{0}', space=sflag, size = 0x8, scoped, tag = 'scoped memory for gcn_forward.1']
    #allocation8 [shape = 'u8[65536]{0}', space=vmem, size = 0x10000, scoped, tag = 'input window, operand 2']
    #allocation9 [shape = 's32[2]{0}', space=sflag, size = 0x8, scoped, tag = 'scoped memory for gcn_forward.1']
    #allocation10 [shape = 'u8[65536]{0}', space=vmem, size = 0x10000, scoped, tag = 'input window, operand 3, single buffered']
    #allocation11 [shape = 'u8[512]{0}', space=vmem, size = 0x400, scoped, tag = 'input window, operand 4, single buffered']
    #allocation12 [shape = 's32[1]{0}', space=sflag, size = 0x4, scoped, tag = 'scoped memory for gcn_forward.1']
    #allocation13 [shape = 'u8[65536]{0}', space=vmem, size = 0x10000, scoped, tag = 'input window, operand 5, single buffered']
    #allocation14 [shape = 'u8[512]{0}', space=vmem, size = 0x400, scoped, tag = 'input window, operand 6, single buffered']
    #allocation15 [shape = 's32[1]{0}', space=sflag, size = 0x4, scoped, tag = 'scoped memory for gcn_forward.1']
    #allocation16 [shape = 'u8[131072]{0}', space=vmem, size = 0x20000, scoped, tag = 'output window, operand 0']
    %16 = vsyncpa [#allocation6], 0
    %s17 = scalar_lea.sflag [#allocation6], 1
    %18 = vsyncpa %s17, 0
    %19 = vsyncpa [#allocation9], 0
    %s20 = scalar_lea.sflag [#allocation9], 1
    %21 = vsyncpa %s20, 0
    %22 = vsyncpa [#allocation12], 0
    %23 = vsyncpa [#allocation15], 0
    %24 = vsyncpa [#allocation7], 0
    %s25 = scalar_lea.sflag [#allocation7], 1
    %26 = vsyncpa %s25, 0
    loop: start=0, step=1, limit=6
    $region2: #{gcn_forward.1} parent=1 // loop_pre_header
      _
    $region3: #{gcn_forward.1} parent=1 // loop_header
      %s28 = sphi 0, %s32
      %p29 = scmp.ge.s32.totalorder %s28, 6
      %s35 = sphi 0, %s47
      %s36 = sphi 0, %s43
      %s37 = sphi 0, %s35
      %s38 = sphi 0, %s36
      %s39 = sphi 0, %s37
      %s40 = sphi 0, %s38
      %s52 = sphi 0, %s54
      %s55 = sphi 0, %s52
      %s56 = sphi 0, %s55
      %s72 = sphi 0, %s56
      %s78 = sphi 0, %s80
      %s81 = sphi 0, %s78
      %s82 = sphi 0, %s81
      %s98 = sphi 0, %s82
      %s102 = sphi 0, %s102
      %s104 = sphi 0, %s102
      %s105 = sphi 0, %s104
      %s119 = sphi 0, %s105
      %s123 = sphi 0, %s123
      %s125 = sphi 0, %s123
      %s126 = sphi 0, %s125
      %s140 = sphi 0, %s126
      %s144 = sphi 0, %s144
      %s146 = sphi 0, %s144
      %s147 = sphi 0, %s146
      %s161 = sphi 0, %s147
      %s165 = sphi 0, %s165
      %s167 = sphi 0, %s165
      %s168 = sphi 0, %s167
      %s182 = sphi 0, %s168
      %s188 = sphi 0, %s190
      %s191 = sphi 0, %s188
      %s192 = sphi 0, %s191
      %s208 = sphi 0, %s192
    $region4: #{gcn_forward.1} parent=1 // loop_header_branch
      %31 = sbr.rel (%p29) target = $region8
    $region5: #{gcn_forward.1} parent=1 // loop_body
      %s33 = ssub.s32 %s28, 1
      %s34 = ssub.s32 %s28, 2
      %s41 = sadd.s32 1, %s36
      %p42 = scmp.ge.s32.totalorder %s41, 2
      %s43 = scalar_select %p42, 0, %s41
      %s44 = sadd.s32 1, %s35
      %s45 = scalar_select %p42, %s44, %s35
      %p46 = scmp.ge.s32.totalorder %s45, 2
      %s47 = scalar_select %p46, 0, %s45
      %s48 = ssub.s32 %s35, %s47
      %s49 = ssub.s32 %s36, %s43
      %s50 = sor.u32 %s48, %s49
      %p51 = scmp.eq.s32.totalorder %s50, 0
      %s53 = sadd.s32 %s52, 1
      %s54 = scalar_select %p51, %s52, %s53
      %p57 = pneg %p51
      %p58 = scmp.eq.s32.totalorder %s28, 3
      %p59 = por %p57, %p58
      %p60 = scmp.ne.s32.totalorder %s52, %s55
      %p61 = scmp.eq.s32.totalorder %s28, 0
      %p62 = por %p60, %p61
      %p63 = scmp.ne.s32.totalorder %s52, %s55
      %p64 = scmp.eq.s32.totalorder %s33, 3
      %p65 = por %p63, %p64
      %p66 = scmp.ne.s32.totalorder %s55, %s56
      %p67 = scmp.eq.s32.totalorder %s33, 0
      %p68 = por %p66, %p67
      %p69 = scmp.ne.s32.totalorder %s55, %s56
      %p70 = scmp.eq.s32.totalorder %s34, 3
      %p71 = por %p69, %p70
      %p73 = scmp.ne.s32.totalorder %s56, %s72
      %p74 = scmp.eq.s32.totalorder %s34, 0
      %p75 = por %p73, %p74
      %s76 = ssub.s32 %s36, %s43
      %p77 = scmp.eq.s32.totalorder %s76, 0
      %s79 = sadd.s32 %s78, 1
      %s80 = scalar_select %p77, %s78, %s79
      %p83 = pneg %p77
      %p84 = scmp.eq.s32.totalorder %s28, 3
      %p85 = por %p83, %p84
      %p86 = scmp.ne.s32.totalorder %s78, %s81
      %p87 = scmp.eq.s32.totalorder %s28, 0
      %p88 = por %p86, %p87
      %p89 = scmp.ne.s32.totalorder %s78, %s81
      %p90 = scmp.eq.s32.totalorder %s33, 3
      %p91 = por %p89, %p90
      %p92 = scmp.ne.s32.totalorder %s81, %s82
      %p93 = scmp.eq.s32.totalorder %s33, 0
      %p94 = por %p92, %p93
      %p95 = scmp.ne.s32.totalorder %s81, %s82
      %p96 = scmp.eq.s32.totalorder %s34, 3
      %p97 = por %p95, %p96
      %p99 = scmp.ne.s32.totalorder %s82, %s98
      %p100 = scmp.eq.s32.totalorder %s34, 0
      %p101 = por %p99, %p100
      %s103 = sadd.s32 %s102, 1
      %p106 = scmp.eq.s32.totalorder %s28, 3
      %p107 = scmp.ne.s32.totalorder %s102, %s104
      %p108 = scmp.eq.s32.totalorder %s28, 0
      %p109 = por %p107, %p108
      %p110 = scmp.ne.s32.totalorder %s102, %s104
      %p111 = scmp.eq.s32.totalorder %s33, 3
      %p112 = por %p110, %p111
      %p113 = scmp.ne.s32.totalorder %s104, %s105
      %p114 = scmp.eq.s32.totalorder %s33, 0
      %p115 = por %p113, %p114
      %p116 = scmp.ne.s32.totalorder %s104, %s105
      %p117 = scmp.eq.s32.totalorder %s34, 3
      %p118 = por %p116, %p117
      %p120 = scmp.ne.s32.totalorder %s105, %s119
      %p121 = scmp.eq.s32.totalorder %s34, 0
      %p122 = por %p120, %p121
      %s124 = sadd.s32 %s123, 1
      %p127 = scmp.eq.s32.totalorder %s28, 3
      %p128 = scmp.ne.s32.totalorder %s123, %s125
      %p129 = scmp.eq.s32.totalorder %s28, 0
      %p130 = por %p128, %p129
      %p131 = scmp.ne.s32.totalorder %s123, %s125
      %p132 = scmp.eq.s32.totalorder %s33, 3
      %p133 = por %p131, %p132
      %p134 = scmp.ne.s32.totalorder %s125, %s126
      %p135 = scmp.eq.s32.totalorder %s33, 0
      %p136 = por %p134, %p135
      %p137 = scmp.ne.s32.totalorder %s125, %s126
      %p138 = scmp.eq.s32.totalorder %s34, 3
      %p139 = por %p137, %p138
      %p141 = scmp.ne.s32.totalorder %s126, %s140
      %p142 = scmp.eq.s32.totalorder %s34, 0
      %p143 = por %p141, %p142
      %s145 = sadd.s32 %s144, 1
      %p148 = scmp.eq.s32.totalorder %s28, 3
      %p149 = scmp.ne.s32.totalorder %s144, %s146
      %p150 = scmp.eq.s32.totalorder %s28, 0
      %p151 = por %p149, %p150
      %p152 = scmp.ne.s32.totalorder %s144, %s146
      %p153 = scmp.eq.s32.totalorder %s33, 3
      %p154 = por %p152, %p153
      %p155 = scmp.ne.s32.totalorder %s146, %s147
      %p156 = scmp.eq.s32.totalorder %s33, 0
      %p157 = por %p155, %p156
      %p158 = scmp.ne.s32.totalorder %s146, %s147
      %p159 = scmp.eq.s32.totalorder %s34, 3
      %p160 = por %p158, %p159
      %p162 = scmp.ne.s32.totalorder %s147, %s161
      %p163 = scmp.eq.s32.totalorder %s34, 0
      %p164 = por %p162, %p163
      %s166 = sadd.s32 %s165, 1
      %p169 = scmp.eq.s32.totalorder %s28, 3
      %p170 = scmp.ne.s32.totalorder %s165, %s167
      %p171 = scmp.eq.s32.totalorder %s28, 0
      %p172 = por %p170, %p171
      %p173 = scmp.ne.s32.totalorder %s165, %s167
      %p174 = scmp.eq.s32.totalorder %s33, 3
      %p175 = por %p173, %p174
      %p176 = scmp.ne.s32.totalorder %s167, %s168
      %p177 = scmp.eq.s32.totalorder %s33, 0
      %p178 = por %p176, %p177
      %p179 = scmp.ne.s32.totalorder %s167, %s168
      %p180 = scmp.eq.s32.totalorder %s34, 3
      %p181 = por %p179, %p180
      %p183 = scmp.ne.s32.totalorder %s168, %s182
      %p184 = scmp.eq.s32.totalorder %s34, 0
      %p185 = por %p183, %p184
      %s186 = ssub.s32 %s35, %s47
      %p187 = scmp.eq.s32.totalorder %s186, 0
      %s189 = sadd.s32 %s188, 1
      %s190 = scalar_select %p187, %s188, %s189
      %p193 = pneg %p187
      %p194 = scmp.eq.s32.totalorder %s28, 3
      %p195 = por %p193, %p194
      %p196 = scmp.ne.s32.totalorder %s188, %s191
      %p197 = scmp.eq.s32.totalorder %s28, 0
      %p198 = por %p196, %p197
      %p199 = scmp.ne.s32.totalorder %s188, %s191
      %p200 = scmp.eq.s32.totalorder %s33, 3
      %p201 = por %p199, %p200
      %p202 = scmp.ne.s32.totalorder %s191, %s192
      %p203 = scmp.eq.s32.totalorder %s33, 0
      %p204 = por %p202, %p203
      %p205 = scmp.ne.s32.totalorder %s191, %s192
      %p206 = scmp.eq.s32.totalorder %s34, 3
      %p207 = por %p205, %p206
      %p209 = scmp.ne.s32.totalorder %s192, %s208
      %p210 = scmp.eq.s32.totalorder %s34, 0
      %p211 = por %p209, %p210
      %p212 = scmp.le.s32.totalorder 1, %s28
      %p213 = scmp.lt.s32.totalorder %s28, 5
      %p214 = pnand %p212, %p213
      %p215 = pneg %p214
      // Predicated region
      $region9: #{gcn_forward.1} parent=5 // pred_check
        _
      $region10: #{gcn_forward.1} parent=5 // pred_check_branch
        %217 = sbr.rel (%p214) target = $region12
      $region11: #{gcn_forward.1} parent=5 // pred_region
        %s218 = ssub.s32 %s28, 1
        // Predicated region
        $region13: #{gcn_forward.1} parent=11 // pred_check
          %p219 = pneg %p115
        $region14: #{gcn_forward.1} parent=11 // pred_check_branch
          %221 = sbr.rel (%p219) target = $region16
        $region15: #{gcn_forward.1} parent=11 // pred_region
          %s223 = ssub.s32 2048, 2048
          %224 = vsyncadd [#allocation9], %s223
          %s225 = sshll.u32 [#allocation10], 4
          %s226 = int_to_ptr.vmem [resolvable:$true] %s225
          %231 = dma.hbm_to_vmem [thread:$0]  %s3, 2048, %s226, [#allocation9], 128, 128, 8
        $region16: #{gcn_forward.1} parent=11 // pred_fallthru
          _
        // Predicated region
        $region17: #{gcn_forward.1} parent=11 // pred_check
          %p232 = pneg %p136
        $region18: #{gcn_forward.1} parent=11 // pred_check_branch
          %234 = sbr.rel (%p232) target = $region20
        $region19: #{gcn_forward.1} parent=11 // pred_region
          %s236 = ssub.s32 16, 16
          %237 = vsyncadd [#allocation12], %s236
          %s239 = sshll.u32 [#allocation11], 4
          %s240 = int_to_ptr.vmem [resolvable:$true] %s239
          %242 = dma.hbm_to_vmem [thread:$0]  %s4, 16, %s240, [#allocation12]
        $region20: #{gcn_forward.1} parent=11 // pred_fallthru
          _
        // Predicated region
        $region21: #{gcn_forward.1} parent=11 // pred_check
          %p243 = pneg %p157
        $region22: #{gcn_forward.1} parent=11 // pred_check_branch
          %245 = sbr.rel (%p243) target = $region24
        $region23: #{gcn_forward.1} parent=11 // pred_region
          %s247 = ssub.s32 2048, 2048
          %248 = vsyncadd [#allocation12], %s247
          %s249 = sshll.u32 [#allocation13], 4
          %s250 = int_to_ptr.vmem [resolvable:$true] %s249
          %255 = dma.hbm_to_vmem [thread:$0]  %s5, 2048, %s250, [#allocation12], 128, 128, 8
        $region24: #{gcn_forward.1} parent=11 // pred_fallthru
          _
        // Predicated region
        $region25: #{gcn_forward.1} parent=11 // pred_check
          %p256 = pneg %p178
        $region26: #{gcn_forward.1} parent=11 // pred_check_branch
          %258 = sbr.rel (%p256) target = $region28
        $region27: #{gcn_forward.1} parent=11 // pred_region
          %s260 = ssub.s32 16, 16
          %261 = vsyncadd [#allocation15], %s260
          %s263 = sshll.u32 [#allocation14], 4
          %s264 = int_to_ptr.vmem [resolvable:$true] %s263
          %266 = dma.hbm_to_vmem [thread:$0]  %s6, 16, %s264, [#allocation15]
        $region28: #{gcn_forward.1} parent=11 // pred_fallthru
          _
      $region12: #{gcn_forward.1} parent=5 // pred_fallthru
        _
      %p267 = scmp.lt.s32.totalorder %s28, 4
      // Predicated region
      $region29: #{gcn_forward.1} parent=5 // pred_check
        %p268 = pneg %p267
      $region30: #{gcn_forward.1} parent=5 // pred_check_branch
        %270 = sbr.rel (%p268) target = $region32
      $region31: #{gcn_forward.1} parent=5 // pred_region
        // Predicated region
        $region33: #{gcn_forward.1} parent=31 // pred_check
          %p271 = pneg %p62
        $region34: #{gcn_forward.1} parent=31 // pred_check_branch
          %273 = sbr.rel (%p271) target = $region36
        $region35: #{gcn_forward.1} parent=31 // pred_region
          %s274 = sand.u32 %s52, 1
          %s275 = scalar_lea.sflag [#allocation6], %s274
          %s276 = sand.u32 %s52, 1
          %s277 = smul.addr %s276, 64
          %s278 = scalar_lea.vmem [#allocation5], %s277
          %s279 = smul.u32 16, %s35
          %s281 = ssub.s32 1024, 1024
          %282 = vsyncadd %s275, %s281
          %s283 = smul.addr %s279, 2
          %s284 = sadd.s32 %s36, %s283
          %s285 = smul.addr %s284, 64
          %s286 = scalar_lea.hbm %s1, %s285
          %s287 = sshll.u32 %s278, 4
          %s288 = int_to_ptr.vmem [resolvable:$true] %s287
          %293 = dma.hbm_to_vmem [thread:$0]  %s286, 1024, %s288, %s275, 128, 64, 4
        $region36: #{gcn_forward.1} parent=31 // pred_fallthru
          _
        // Predicated region
        $region37: #{gcn_forward.1} parent=31 // pred_check
          %p294 = pneg %p88
        $region38: #{gcn_forward.1} parent=31 // pred_check_branch
          %296 = sbr.rel (%p294) target = $region40
        $region39: #{gcn_forward.1} parent=31 // pred_region
          %s297 = sand.u32 %s28, 1
          %s298 = scalar_lea.sflag [#allocation9], %s297
          %s299 = sand.u32 %s78, 1
          %s300 = smul.addr %s299, 64
          %s301 = scalar_lea.vmem [#allocation8], %s300
          %s302 = smul.u32 16, %s36
          %s304 = ssub.s32 1024, 1024
          %305 = vsyncadd %s298, %s304
          %s306 = smul.addr %s302, 64
          %s307 = scalar_lea.hbm %s2, %s306
          %s308 = sshll.u32 %s301, 4
          %s309 = int_to_ptr.vmem [resolvable:$true] %s308
          %314 = dma.hbm_to_vmem [thread:$0]  %s307, 1024, %s309, %s298, 64, 64, 4
        $region40: #{gcn_forward.1} parent=31 // pred_fallthru
          _
      $region32: #{gcn_forward.1} parent=5 // pred_fallthru
        _
      %p315 = scmp.le.s32.totalorder 1, %s28
      %p316 = scmp.lt.s32.totalorder %s28, 5
      %p317 = pnand %p315, %p316
      %p318 = pneg %p317
      // Predicated region
      $region41: #{gcn_forward.1} parent=5 // pred_check
        _
      $region42: #{gcn_forward.1} parent=5 // pred_check_branch
        %320 = sbr.rel (%p317) target = $region44
      $region43: #{gcn_forward.1} parent=5 // pred_region
        %s321 = ssub.s32 %s28, 1
        %s322 = sand.u32 %s55, 1
        %s323 = scalar_lea.sflag [#allocation6], %s322
        %s324 = sand.u32 %s55, 1
        %s325 = smul.addr %s324, 64
        %s326 = scalar_lea.vmem [#allocation5], %s325
        // Predicated region
        $region45: #{gcn_forward.1} parent=43 // pred_check
          %p327 = pneg %p68
        $region46: #{gcn_forward.1} parent=43 // pred_check_branch
          %329 = sbr.rel (%p327) target = $region48
        $region47: #{gcn_forward.1} parent=43 // pred_region
          %330 = dma.done %s323, 1024
        $region48: #{gcn_forward.1} parent=43 // pred_fallthru
          _
        %s331 = sand.u32 %s33, 1
        %s332 = scalar_lea.sflag [#allocation9], %s331
        %s333 = sand.u32 %s81, 1
        %s334 = smul.addr %s333, 64
        %s335 = scalar_lea.vmem [#allocation8], %s334
        // Predicated region
        $region49: #{gcn_forward.1} parent=43 // pred_check
          %p336 = pneg %p94
        $region50: #{gcn_forward.1} parent=43 // pred_check_branch
          %338 = sbr.rel (%p336) target = $region52
        $region51: #{gcn_forward.1} parent=43 // pred_region
          %339 = dma.done %s332, 1024
        $region52: #{gcn_forward.1} parent=43 // pred_fallthru
          _
        // Predicated region
        $region53: #{gcn_forward.1} parent=43 // pred_check
          %p340 = pneg %p115
        $region54: #{gcn_forward.1} parent=43 // pred_check_branch
          %342 = sbr.rel (%p340) target = $region56
        $region55: #{gcn_forward.1} parent=43 // pred_region
          %343 = dma.done [#allocation9], 2048
        $region56: #{gcn_forward.1} parent=43 // pred_fallthru
          _
        // Predicated region
        $region57: #{gcn_forward.1} parent=43 // pred_check
          %p344 = pneg %p136
        $region58: #{gcn_forward.1} parent=43 // pred_check_branch
          %346 = sbr.rel (%p344) target = $region60
        $region59: #{gcn_forward.1} parent=43 // pred_region
          %347 = dma.done [#allocation12], 16
        $region60: #{gcn_forward.1} parent=43 // pred_fallthru
          _
        // Predicated region
        $region61: #{gcn_forward.1} parent=43 // pred_check
          %p348 = pneg %p157
        $region62: #{gcn_forward.1} parent=43 // pred_check_branch
          %350 = sbr.rel (%p348) target = $region64
        $region63: #{gcn_forward.1} parent=43 // pred_region
          %351 = dma.done [#allocation12], 2048
        $region64: #{gcn_forward.1} parent=43 // pred_fallthru
          _
        // Predicated region
        $region65: #{gcn_forward.1} parent=43 // pred_check
          %p352 = pneg %p178
        $region66: #{gcn_forward.1} parent=43 // pred_check_branch
          %354 = sbr.rel (%p352) target = $region68
        $region67: #{gcn_forward.1} parent=43 // pred_region
          %355 = dma.done [#allocation15], 16
        $region68: #{gcn_forward.1} parent=43 // pred_fallthru
          _
        %s356 = sand.u32 %s55, 1
        %s357 = scalar_lea.sflag [#allocation6], %s356
        %s358 = sand.u32 %s55, 1
        %s359 = smul.addr %s358, 64
        %s360 = scalar_lea.vmem [#allocation5], %s359
        %p361 = pneg %p68
        %p362 = pneg %p65
        %s363 = sand.u32 %s33, 1
        %s364 = scalar_lea.sflag [#allocation9], %s363
        %s365 = sand.u32 %s81, 1
        %s366 = smul.addr %s365, 64
        %s367 = scalar_lea.vmem [#allocation8], %s366
        %p368 = pneg %p94
        %p369 = pneg %p91
        %p370 = pneg %p115
        %p371 = pneg %p112
        %p372 = pneg %p136
        %p373 = pneg %p133
        %p374 = pneg %p157
        %p375 = pneg %p154
        %p376 = pneg %p178
        %p377 = pneg %p175
        %p378 = pneg %p204
        %p379 = pneg %p201
        %s380 = sand.u32 %s191, 1
        %s381 = scalar_lea.sflag [#allocation7], %s380
        %s382 = sand.u32 %s191, 1
        %s383 = smul.addr %s382, 128
        %s384 = scalar_lea.vmem [#allocation16], %s383
        %s385 = smul.u32 16, %s37
        %s386 = smul.u32 16, %s38
        %s387 = smul.u32 16, %s37
        %p389 = scmp.eq.s32.totalorder %s38, 0
        // Predicated region
        $region69: #{gcn_forward.1} parent=43 // pred_check
          %p390 = pneg %p389
        $region70: #{gcn_forward.1} parent=43 // pred_check_branch
          %392 = sbr.rel (%p390) target = $region72
        $region71: #{gcn_forward.1} parent=43 // pred_region
          %393 = vst [vmem:[#allocation2] sm:$0xff] 0.0
          %394 = vst [vmem:[#allocation2 + $0x8] sm:$0xff] 0.0
          %395 = vst [vmem:[#allocation2 + $0x10] sm:$0xff] 0.0
          %396 = vst [vmem:[#allocation2 + $0x18] sm:$0xff] 0.0
          %397 = vst [vmem:[#allocation2 + $0x20] sm:$0xff] 0.0
          %398 = vst [vmem:[#allocation2 + $0x28] sm:$0xff] 0.0
          %399 = vst [vmem:[#allocation2 + $0x30] sm:$0xff] 0.0
          %400 = vst [vmem:[#allocation2 + $0x38] sm:$0xff] 0.0
          %401 = vst [vmem:[#allocation2 + $0x40] sm:$0xff] 0.0
          %402 = vst [vmem:[#allocation2 + $0x48] sm:$0xff] 0.0
          %403 = vst [vmem:[#allocation2 + $0x50] sm:$0xff] 0.0
          %404 = vst [vmem:[#allocation2 + $0x58] sm:$0xff] 0.0
          %405 = vst [vmem:[#allocation2 + $0x60] sm:$0xff] 0.0
          %406 = vst [vmem:[#allocation2 + $0x68] sm:$0xff] 0.0
          %407 = vst [vmem:[#allocation2 + $0x70] sm:$0xff] 0.0
          %408 = vst [vmem:[#allocation2 + $0x78] sm:$0xff] 0.0
        $region72: #{gcn_forward.1} parent=43 // pred_fallthru
          _
        %s409 = sshra.s32 %s38, 7
        %s410 = sand.u32 %s38, 127
        %s411 = sadd.s32 %s409, %s37
        %s412 = smul.u32 %s411, 128
        %s413 = sshra.s32 %s38, 7
        %s414 = sand.u32 %s38, 127
        %s415 = sadd.s32 %s412, %s414
        %s416 = sld [smem:[#allocation4 + %s415]]
        %p417 = scmp.ne.s32.totalorder %s416, 0
        // Predicated region
        $region73: #{gcn_forward.1} parent=43 // pred_check
          %p418 = pneg %p417
        $region74: #{gcn_forward.1} parent=43 // pred_check_branch
          %420 = sbr.rel (%p418) target = $region76
        $region75: #{gcn_forward.1} parent=43 // pred_region
          %v421 = vld [vmem:[#allocation2] sm:$0xff]
          %v422 = vld [vmem:[#allocation2 + $0x8] sm:$0xff]
          %v423 = vld [vmem:[#allocation2 + $0x10] sm:$0xff]
          %v424 = vld [vmem:[#allocation2 + $0x18] sm:$0xff]
          %v425 = vld [vmem:[#allocation2 + $0x20] sm:$0xff]
          %v426 = vld [vmem:[#allocation2 + $0x28] sm:$0xff]
          %v427 = vld [vmem:[#allocation2 + $0x30] sm:$0xff]
          %v428 = vld [vmem:[#allocation2 + $0x38] sm:$0xff]
          %v429 = vld [vmem:[#allocation2 + $0x40] sm:$0xff]
          %v430 = vld [vmem:[#allocation2 + $0x48] sm:$0xff]
          %v431 = vld [vmem:[#allocation2 + $0x50] sm:$0xff]
          %v432 = vld [vmem:[#allocation2 + $0x58] sm:$0xff]
          %v433 = vld [vmem:[#allocation2 + $0x60] sm:$0xff]
          %v434 = vld [vmem:[#allocation2 + $0x68] sm:$0xff]
          %v435 = vld [vmem:[#allocation2 + $0x70] sm:$0xff]
          %v436 = vld [vmem:[#allocation2 + $0x78] sm:$0xff]
          %v437 = vld [vmem:[%s326] sm:$0xf]
          %v438 = vld [vmem:[%s326 + $0x4] sm:$0xf]
          %v439 = vld [vmem:[%s326 + $0x8] sm:$0xf]
          %v440 = vld [vmem:[%s326 + $0xc] sm:$0xf]
          %v441 = vld [vmem:[%s326 + $0x10] sm:$0xf]
          %v442 = vld [vmem:[%s326 + $0x14] sm:$0xf]
          %v443 = vld [vmem:[%s326 + $0x18] sm:$0xf]
          %v444 = vld [vmem:[%s326 + $0x1c] sm:$0xf]
          %v445 = vld [vmem:[%s326 + $0x20] sm:$0xf]
          %v446 = vld [vmem:[%s326 + $0x24] sm:$0xf]
          %v447 = vld [vmem:[%s326 + $0x28] sm:$0xf]
          %v448 = vld [vmem:[%s326 + $0x2c] sm:$0xf]
          %v449 = vld [vmem:[%s326 + $0x30] sm:$0xf]
          %v450 = vld [vmem:[%s326 + $0x34] sm:$0xf]
          %v451 = vld [vmem:[%s326 + $0x38] sm:$0xf]
          %v452 = vld [vmem:[%s326 + $0x3c] sm:$0xf]
          %v453 = vld [vmem:[%s335] sm:$0xf]
          %v454 = vld [vmem:[%s335 + $0x4] sm:$0xf]
          %v455 = vld [vmem:[%s335 + $0x8] sm:$0xf]
          %v456 = vld [vmem:[%s335 + $0xc] sm:$0xf]
          %v457 = vld [vmem:[%s335 + $0x10] sm:$0xf]
          %v458 = vld [vmem:[%s335 + $0x14] sm:$0xf]
          %v459 = vld [vmem:[%s335 + $0x18] sm:$0xf]
          %v460 = vld [vmem:[%s335 + $0x1c] sm:$0xf]
          %v461 = vld [vmem:[%s335 + $0x20] sm:$0xf]
          %v462 = vld [vmem:[%s335 + $0x24] sm:$0xf]
          %v463 = vld [vmem:[%s335 + $0x28] sm:$0xf]
          %v464 = vld [vmem:[%s335 + $0x2c] sm:$0xf]
          %v465 = vld [vmem:[%s335 + $0x30] sm:$0xf]
          %v466 = vld [vmem:[%s335 + $0x34] sm:$0xf]
          %v467 = vld [vmem:[%s335 + $0x38] sm:$0xf]
          %v468 = vld [vmem:[%s335 + $0x3c] sm:$0xf]
          %v485 = vunpack.c.l.b16 %v437
          %v486 = vunpack.c.l.b16 %v438
          %v487 = vunpack.c.l.b16 %v439
          %v488 = vunpack.c.l.b16 %v440
          %v489 = vunpack.c.l.b16 %v441
          %v490 = vunpack.c.l.b16 %v442
          %v491 = vunpack.c.l.b16 %v443
          %v492 = vunpack.c.l.b16 %v444
          %v493 = vunpack.c.l.b16 %v445
          %v494 = vunpack.c.l.b16 %v446
          %v495 = vunpack.c.l.b16 %v447
          %v496 = vunpack.c.l.b16 %v448
          %v497 = vunpack.c.l.b16 %v449
          %v498 = vunpack.c.l.b16 %v450
          %v499 = vunpack.c.l.b16 %v451
          %v500 = vunpack.c.l.b16 %v452
          %v501 = vpack.c.b16 %v486, %v485
          %v502 = vpack.c.b16 %v488, %v487
          %v503 = vpack.c.b16 %v490, %v489
          %v504 = vpack.c.b16 %v492, %v491
          %v505 = vpack.c.b16 %v494, %v493
          %v506 = vpack.c.b16 %v496, %v495
          %v507 = vpack.c.b16 %v498, %v497
          %v508 = vpack.c.b16 %v500, %v499
          %v533 = vunpack.c.l.b16 %v453
          %v534 = vunpack.c.l.b16 %v454
          %v535 = vunpack.c.l.b16 %v455
          %v536 = vunpack.c.l.b16 %v456
          %v537 = vunpack.c.l.b16 %v457
          %v538 = vunpack.c.l.b16 %v458
          %v539 = vunpack.c.l.b16 %v459
          %v540 = vunpack.c.l.b16 %v460
          %v541 = vunpack.c.l.b16 %v461
          %v542 = vunpack.c.l.b16 %v462
          %v543 = vunpack.c.l.b16 %v463
          %v544 = vunpack.c.l.b16 %v464
          %v545 = vunpack.c.l.b16 %v465
          %v546 = vunpack.c.l.b16 %v466
          %v547 = vunpack.c.l.b16 %v467
          %v548 = vunpack.c.l.b16 %v468
          %v549 = vpack.c.b16 %v534, %v533
          %v550 = vpack.c.b16 %v536, %v535
          %v551 = vpack.c.b16 %v538, %v537
          %v552 = vpack.c.b16 %v540, %v539
          %v553 = vpack.c.b16 %v542, %v541
          %v554 = vpack.c.b16 %v544, %v543
          %v555 = vpack.c.b16 %v546, %v545
          %v556 = vpack.c.b16 %v548, %v547
          %565 = vmatprep.subr.bf16.mxu0 0
          %566 = vmatpush1.bf16.msra.mxu0 %v549
          %567 = vmatprep.subr.bf16.mxu0 0
          %568 = vmatpush1.bf16.msra.mxu0 %v550
          %569 = vmatprep.subr.bf16.mxu0 0
          %570 = vmatpush1.bf16.msra.mxu0 %v551
          %571 = vmatprep.subr.bf16.mxu0 0
          %572 = vmatpush1.bf16.msra.mxu0 %v552
          %573 = vmatprep.subr.bf16.mxu0 0
          %574 = vmatpush1.bf16.msra.mxu0 %v553
          %575 = vmatprep.subr.bf16.mxu0 0
          %576 = vmatpush1.bf16.msra.mxu0 %v554
          %577 = vmatprep.subr.bf16.mxu0 0
          %578 = vmatpush1.bf16.msra.mxu0 %v555
          %579 = vmatprep.subr.bf16.mxu0 0
          %580 = vmatpush1.bf16.msra.mxu0 %v556
          %581 = vmatprep.subr.bf16.mxu0 0
          %582 = vmatpush1.bf16.msra.mxu0 0
          %583 = vmatprep.subr.bf16.mxu0 0
          %584 = vmatpush1.bf16.msra.mxu0 0
          %585 = vmatprep.subr.bf16.mxu0 0
          %586 = vmatpush1.bf16.msra.mxu0 0
          %587 = vmatprep.subr.bf16.mxu0 0
          %588 = vmatpush1.bf16.msra.mxu0 0
          %589 = vmatprep.subr.bf16.mxu0 0
          %590 = vmatpush1.bf16.msra.mxu0 0
          %591 = vmatprep.subr.bf16.mxu0 0
          %592 = vmatpush1.bf16.msra.mxu0 0
          %593 = vmatprep.subr.bf16.mxu0 0
          %594 = vmatpush1.bf16.msra.mxu0 0
          %595 = vmatprep.subr.bf16.mxu0 0
          %596 = vmatpush1.bf16.msra.mxu0 0
          %597 = vmatprep.mubr.bf16.mxu0 0
          %598 = vmatmul.mubr.bf16.gmra.mrb[0].mxu0 %v501
          %v599 = vpop.f32.mrb[0].mxu0
          %v600 = vadd.f32 0.0, %v599
          %v601 = vpop.f32.mrb[0].mxu0
          %v602 = vpop.f32.mrb[0].mxu0
          %v603 = vadd.f32 0.0, %v602
          %v604 = vpop.f32.mrb[0].mxu0
          %605 = vmatprep.mubr.bf16.mxu0 0
          %606 = vmatmul.mubr.bf16.gmra.mrb[0].mxu0 %v502
          %v607 = vpop.f32.mrb[0].mxu0
          %v608 = vadd.f32 0.0, %v607
          %v609 = vpop.f32.mrb[0].mxu0
          %v610 = vpop.f32.mrb[0].mxu0
          %v611 = vadd.f32 0.0, %v610
          %v612 = vpop.f32.mrb[0].mxu0
          %613 = vmatprep.mubr.bf16.mxu0 0
          %614 = vmatmul.mubr.bf16.gmra.mrb[0].mxu0 %v503
          %v615 = vpop.f32.mrb[0].mxu0
          %v616 = vadd.f32 0.0, %v615
          %v617 = vpop.f32.mrb[0].mxu0
          %v618 = vpop.f32.mrb[0].mxu0
          %v619 = vadd.f32 0.0, %v618
          %v620 = vpop.f32.mrb[0].mxu0
          %621 = vmatprep.mubr.bf16.mxu0 0
          %622 = vmatmul.mubr.bf16.gmra.mrb[0].mxu0 %v504
          %v623 = vpop.f32.mrb[0].mxu0
          %v624 = vadd.f32 0.0, %v623
          %v625 = vpop.f32.mrb[0].mxu0
          %v626 = vpop.f32.mrb[0].mxu0
          %v627 = vadd.f32 0.0, %v626
          %v628 = vpop.f32.mrb[0].mxu0
          %629 = vmatprep.mubr.bf16.mxu0 0
          %630 = vmatmul.mubr.bf16.gmra.mrb[0].mxu0 %v505
          %v631 = vpop.f32.mrb[0].mxu0
          %v632 = vadd.f32 0.0, %v631
          %v633 = vpop.f32.mrb[0].mxu0
          %v634 = vpop.f32.mrb[0].mxu0
          %v635 = vadd.f32 0.0, %v634
          %v636 = vpop.f32.mrb[0].mxu0
          %637 = vmatprep.mubr.bf16.mxu0 0
          %638 = vmatmul.mubr.bf16.gmra.mrb[0].mxu0 %v506
          %v639 = vpop.f32.mrb[0].mxu0
          %v640 = vadd.f32 0.0, %v639
          %v641 = vpop.f32.mrb[0].mxu0
          %v642 = vpop.f32.mrb[0].mxu0
          %v643 = vadd.f32 0.0, %v642
          %v644 = vpop.f32.mrb[0].mxu0
          %645 = vmatprep.mubr.bf16.mxu0 0
          %646 = vmatmul.mubr.bf16.gmra.mrb[0].mxu0 %v507
          %v647 = vpop.f32.mrb[0].mxu0
          %v648 = vadd.f32 0.0, %v647
          %v649 = vpop.f32.mrb[0].mxu0
          %v650 = vpop.f32.mrb[0].mxu0
          %v651 = vadd.f32 0.0, %v650
          %v652 = vpop.f32.mrb[0].mxu0
          %653 = vmatprep.mubr.bf16.mxu0 0
          %654 = vmatmul.mubr.bf16.gmra.mrb[0].mxu0 %v508
          %v655 = vpop.f32.mrb[0].mxu0
          %v656 = vadd.f32 0.0, %v655
          %v657 = vpop.f32.mrb[0].mxu0
          %v658 = vpop.f32.mrb[0].mxu0
          %v659 = vadd.f32 0.0, %v658
          %v660 = vpop.f32.mrb[0].mxu0
          %661 = vdwg.mxu0
          %v662 = vadd.f32 %v421, %v600
          %v663 = vadd.f32 %v422, %v603
          %v664 = vadd.f32 %v423, %v608
          %v665 = vadd.f32 %v424, %v611
          %v666 = vadd.f32 %v425, %v616
          %v667 = vadd.f32 %v426, %v619
          %v668 = vadd.f32 %v427, %v624
          %v669 = vadd.f32 %v428, %v627
          %v670 = vadd.f32 %v429, %v632
          %v671 = vadd.f32 %v430, %v635
          %v672 = vadd.f32 %v431, %v640
          %v673 = vadd.f32 %v432, %v643
          %v674 = vadd.f32 %v433, %v648
          %v675 = vadd.f32 %v434, %v651
          %v676 = vadd.f32 %v435, %v656
          %v677 = vadd.f32 %v436, %v659
          %678 = vst [vmem:[#allocation2] sm:$0xff] %v662
          %679 = vst [vmem:[#allocation2 + $0x8] sm:$0xff] %v663
          %680 = vst [vmem:[#allocation2 + $0x10] sm:$0xff] %v664
          %681 = vst [vmem:[#allocation2 + $0x18] sm:$0xff] %v665
          %682 = vst [vmem:[#allocation2 + $0x20] sm:$0xff] %v666
          %683 = vst [vmem:[#allocation2 + $0x28] sm:$0xff] %v667
          %684 = vst [vmem:[#allocation2 + $0x30] sm:$0xff] %v668
          %685 = vst [vmem:[#allocation2 + $0x38] sm:$0xff] %v669
          %686 = vst [vmem:[#allocation2 + $0x40] sm:$0xff] %v670
          %687 = vst [vmem:[#allocation2 + $0x48] sm:$0xff] %v671
          %688 = vst [vmem:[#allocation2 + $0x50] sm:$0xff] %v672
          %689 = vst [vmem:[#allocation2 + $0x58] sm:$0xff] %v673
          %690 = vst [vmem:[#allocation2 + $0x60] sm:$0xff] %v674
          %691 = vst [vmem:[#allocation2 + $0x68] sm:$0xff] %v675
          %692 = vst [vmem:[#allocation2 + $0x70] sm:$0xff] %v676
          %693 = vst [vmem:[#allocation2 + $0x78] sm:$0xff] %v677
        $region76: #{gcn_forward.1} parent=43 // pred_fallthru
          _
        %p694 = scmp.eq.s32.totalorder %s38, 1
        // Predicated region
        $region77: #{gcn_forward.1} parent=43 // pred_check
          %p695 = pneg %p694
        $region78: #{gcn_forward.1} parent=43 // pred_check_branch
          %697 = sbr.rel (%p695) target = $region80
        $region79: #{gcn_forward.1} parent=43 // pred_region
          %v698 = vld [vmem:[#allocation2] sm:$0xff]
          %v699 = vld [vmem:[#allocation2 + $0x8] sm:$0xff]
          %v700 = vld [vmem:[#allocation2 + $0x10] sm:$0xff]
          %v701 = vld [vmem:[#allocation2 + $0x18] sm:$0xff]
          %v702 = vld [vmem:[#allocation2 + $0x20] sm:$0xff]
          %v703 = vld [vmem:[#allocation2 + $0x28] sm:$0xff]
          %v704 = vld [vmem:[#allocation2 + $0x30] sm:$0xff]
          %v705 = vld [vmem:[#allocation2 + $0x38] sm:$0xff]
          %v706 = vld [vmem:[#allocation2 + $0x40] sm:$0xff]
          %v707 = vld [vmem:[#allocation2 + $0x48] sm:$0xff]
          %v708 = vld [vmem:[#allocation2 + $0x50] sm:$0xff]
          %v709 = vld [vmem:[#allocation2 + $0x58] sm:$0xff]
          %v710 = vld [vmem:[#allocation2 + $0x60] sm:$0xff]
          %v711 = vld [vmem:[#allocation2 + $0x68] sm:$0xff]
          %v712 = vld [vmem:[#allocation2 + $0x70] sm:$0xff]
          %v713 = vld [vmem:[#allocation2 + $0x78] sm:$0xff]
          %v714 = vld [vmem:[#allocation10] sm:$0xff]
          %v715 = vld [vmem:[#allocation10 + $0x8] sm:$0xff]
          %v716 = vld [vmem:[#allocation10 + $0x10] sm:$0xff]
          %v717 = vld [vmem:[#allocation10 + $0x18] sm:$0xff]
          %v718 = vld [vmem:[#allocation10 + $0x20] sm:$0xff]
          %v719 = vld [vmem:[#allocation10 + $0x28] sm:$0xff]
          %v720 = vld [vmem:[#allocation10 + $0x30] sm:$0xff]
          %v721 = vld [vmem:[#allocation10 + $0x38] sm:$0xff]
          %v722 = vld [vmem:[#allocation10 + $0x40] sm:$0xff]
          %v723 = vld [vmem:[#allocation10 + $0x48] sm:$0xff]
          %v724 = vld [vmem:[#allocation10 + $0x50] sm:$0xff]
          %v725 = vld [vmem:[#allocation10 + $0x58] sm:$0xff]
          %v726 = vld [vmem:[#allocation10 + $0x60] sm:$0xff]
          %v727 = vld [vmem:[#allocation10 + $0x68] sm:$0xff]
          %v728 = vld [vmem:[#allocation10 + $0x70] sm:$0xff]
          %v729 = vld [vmem:[#allocation10 + $0x78] sm:$0xff]
          %v730 = vld [vmem:[#allocation11] sm:$0x1]
          %v732 = vlaneseq
          %v733 = vshrl.u32 %v732, 7
          %v734 = vsub.s32 0, %v733
          %v735 = vrot.slane %v730, %v734
          %737 = vmatprep.subr.mxu0 0.0
          %738 = vmatpush1.msra.mxu0 %v714
          %739 = vmatprep.subr.mxu0 0.0
          %740 = vmatpush1.msra.mxu0 %v715
          %741 = vmatprep.subr.mxu0 0.0
          %742 = vmatpush1.msra.mxu0 %v716
          %743 = vmatprep.subr.mxu0 0.0
          %744 = vmatpush1.msra.mxu0 %v717
          %745 = vmatprep.subr.mxu0 0.0
          %746 = vmatpush1.msra.mxu0 %v718
          %747 = vmatprep.subr.mxu0 0.0
          %748 = vmatpush1.msra.mxu0 %v719
          %749 = vmatprep.subr.mxu0 0.0
          %750 = vmatpush1.msra.mxu0 %v720
          %751 = vmatprep.subr.mxu0 0.0
          %752 = vmatpush1.msra.mxu0 %v721
          %753 = vmatprep.subr.mxu0 0.0
          %754 = vmatpush1.msra.mxu0 %v722
          %755 = vmatprep.subr.mxu0 0.0
          %756 = vmatpush1.msra.mxu0 %v723
          %757 = vmatprep.subr.mxu0 0.0
          %758 = vmatpush1.msra.mxu0 %v724
          %759 = vmatprep.subr.mxu0 0.0
          %760 = vmatpush1.msra.mxu0 %v725
          %761 = vmatprep.subr.mxu0 0.0
          %762 = vmatpush1.msra.mxu0 %v726
          %763 = vmatprep.subr.mxu0 0.0
          %764 = vmatpush1.msra.mxu0 %v727
          %765 = vmatprep.subr.mxu0 0.0
          %766 = vmatpush1.msra.mxu0 %v728
          %767 = vmatprep.subr.mxu0 0.0
          %768 = vmatpush1.msra.mxu0 %v729
          %769 = vmatprep.subr.mxu0 0.0
          %770 = vmatpush1.msra.mxu0 0.0
          %771 = vmatprep.subr.mxu0 0.0
          %772 = vmatpush1.msra.mxu0 0.0
          %773 = vmatprep.subr.mxu0 0.0
          %774 = vmatpush1.msra.mxu0 0.0
          %775 = vmatprep.subr.mxu0 0.0
          %776 = vmatpush1.msra.mxu0 0.0
          %777 = vmatprep.subr.mxu0 0.0
          %778 = vmatpush1.msra.mxu0 0.0
          %779 = vmatprep.subr.mxu0 0.0
          %780 = vmatpush1.msra.mxu0 0.0
          %781 = vmatprep.subr.mxu0 0.0
          %782 = vmatpush1.msra.mxu0 0.0
          %783 = vmatprep.subr.mxu0 0.0
          %784 = vmatpush1.msra.mxu0 0.0
          %785 = vmatprep.subr.mxu0 0.0
          %786 = vmatpush1.msra.mxu0 0.0
          %787 = vmatprep.subr.mxu0 0.0
          %788 = vmatpush1.msra.mxu0 0.0
          %789 = vmatprep.subr.mxu0 0.0
          %790 = vmatpush1.msra.mxu0 0.0
          %791 = vmatprep.subr.mxu0 0.0
          %792 = vmatpush1.msra.mxu0 0.0
          %793 = vmatprep.subr.mxu0 0.0
          %794 = vmatpush1.msra.mxu0 0.0
          %795 = vmatprep.subr.mxu0 0.0
          %796 = vmatpush1.msra.mxu0 0.0
          %797 = vmatprep.subr.mxu0 0.0
          %798 = vmatpush1.msra.mxu0 0.0
          %799 = vmatprep.subr.mxu0 0.0
          %800 = vmatpush1.msra.mxu0 0.0
          %801 = vmatprep.mubr.f32.mxu0 0.0
          %802 = vmatmul.mubr.f32.gmra.mrb[0].mxu0 %v698
          %v803 = vpop.f32.mrb[0].mxu0
          %v804 = vadd.f32 %v735, %v803
          %v805 = vpop.f32.mrb[0].mxu0
          %806 = vmatprep.mubr.f32.mxu0 0.0
          %807 = vmatmul.mubr.f32.gmra.mrb[0].mxu0 %v699
          %v808 = vpop.f32.mrb[0].mxu0
          %v809 = vadd.f32 %v735, %v808
          %v810 = vpop.f32.mrb[0].mxu0
          %811 = vmatprep.mubr.f32.mxu0 0.0
          %812 = vmatmul.mubr.f32.gmra.mrb[0].mxu0 %v700
          %v813 = vpop.f32.mrb[0].mxu0
          %v814 = vadd.f32 %v735, %v813
          %v815 = vpop.f32.mrb[0].mxu0
          %816 = vmatprep.mubr.f32.mxu0 0.0
          %817 = vmatmul.mubr.f32.gmra.mrb[0].mxu0 %v701
          %v818 = vpop.f32.mrb[0].mxu0
          %v819 = vadd.f32 %v735, %v818
          %v820 = vpop.f32.mrb[0].mxu0
          %821 = vmatprep.mubr.f32.mxu0 0.0
          %822 = vmatmul.mubr.f32.gmra.mrb[0].mxu0 %v702
          %v823 = vpop.f32.mrb[0].mxu0
          %v824 = vadd.f32 %v735, %v823
          %v825 = vpop.f32.mrb[0].mxu0
          %826 = vmatprep.mubr.f32.mxu0 0.0
          %827 = vmatmul.mubr.f32.gmra.mrb[0].mxu0 %v703
          %v828 = vpop.f32.mrb[0].mxu0
          %v829 = vadd.f32 %v735, %v828
          %v830 = vpop.f32.mrb[0].mxu0
          %831 = vmatprep.mubr.f32.mxu0 0.0
          %832 = vmatmul.mubr.f32.gmra.mrb[0].mxu0 %v704
          %v833 = vpop.f32.mrb[0].mxu0
          %v834 = vadd.f32 %v735, %v833
          %v835 = vpop.f32.mrb[0].mxu0
          %836 = vmatprep.mubr.f32.mxu0 0.0
          %837 = vmatmul.mubr.f32.gmra.mrb[0].mxu0 %v705
          %v838 = vpop.f32.mrb[0].mxu0
          %v839 = vadd.f32 %v735, %v838
          %v840 = vpop.f32.mrb[0].mxu0
          %841 = vmatprep.mubr.f32.mxu0 0.0
          %842 = vmatmul.mubr.f32.gmra.mrb[0].mxu0 %v706
          %v843 = vpop.f32.mrb[0].mxu0
          %v844 = vadd.f32 %v735, %v843
          %v845 = vpop.f32.mrb[0].mxu0
          %846 = vmatprep.mubr.f32.mxu0 0.0
          %847 = vmatmul.mubr.f32.gmra.mrb[0].mxu0 %v707
          %v848 = vpop.f32.mrb[0].mxu0
          %v849 = vadd.f32 %v735, %v848
          %v850 = vpop.f32.mrb[0].mxu0
          %851 = vmatprep.mubr.f32.mxu0 0.0
          %852 = vmatmul.mubr.f32.gmra.mrb[0].mxu0 %v708
          %v853 = vpop.f32.mrb[0].mxu0
          %v854 = vadd.f32 %v735, %v853
          %v855 = vpop.f32.mrb[0].mxu0
          %856 = vmatprep.mubr.f32.mxu0 0.0
          %857 = vmatmul.mubr.f32.gmra.mrb[0].mxu0 %v709
          %v858 = vpop.f32.mrb[0].mxu0
          %v859 = vadd.f32 %v735, %v858
          %v860 = vpop.f32.mrb[0].mxu0
          %861 = vmatprep.mubr.f32.mxu0 0.0
          %862 = vmatmul.mubr.f32.gmra.mrb[0].mxu0 %v710
          %v863 = vpop.f32.mrb[0].mxu0
          %v864 = vadd.f32 %v735, %v863
          %v865 = vpop.f32.mrb[0].mxu0
          %866 = vmatprep.mubr.f32.mxu0 0.0
          %867 = vmatmul.mubr.f32.gmra.mrb[0].mxu0 %v711
          %v868 = vpop.f32.mrb[0].mxu0
          %v869 = vadd.f32 %v735, %v868
          %v870 = vpop.f32.mrb[0].mxu0
          %871 = vmatprep.mubr.f32.mxu0 0.0
          %872 = vmatmul.mubr.f32.gmra.mrb[0].mxu0 %v712
          %v873 = vpop.f32.mrb[0].mxu0
          %v874 = vadd.f32 %v735, %v873
          %v875 = vpop.f32.mrb[0].mxu0
          %876 = vmatprep.mubr.f32.mxu0 0.0
          %877 = vmatmul.mubr.f32.gmra.mrb[0].mxu0 %v713
          %v878 = vpop.f32.mrb[0].mxu0
          %v879 = vadd.f32 %v735, %v878
          %v880 = vpop.f32.mrb[0].mxu0
          %881 = vdwg.mxu0
          %v882 = vld [vmem:[#allocation13] sm:$0xff]
          %v883 = vld [vmem:[#allocation13 + $0x8] sm:$0xff]
          %v884 = vld [vmem:[#allocation13 + $0x10] sm:$0xff]
          %v885 = vld [vmem:[#allocation13 + $0x18] sm:$0xff]
          %v886 = vld [vmem:[#allocation13 + $0x20] sm:$0xff]
          %v887 = vld [vmem:[#allocation13 + $0x28] sm:$0xff]
          %v888 = vld [vmem:[#allocation13 + $0x30] sm:$0xff]
          %v889 = vld [vmem:[#allocation13 + $0x38] sm:$0xff]
          %v890 = vld [vmem:[#allocation13 + $0x40] sm:$0xff]
          %v891 = vld [vmem:[#allocation13 + $0x48] sm:$0xff]
          %v892 = vld [vmem:[#allocation13 + $0x50] sm:$0xff]
          %v893 = vld [vmem:[#allocation13 + $0x58] sm:$0xff]
          %v894 = vld [vmem:[#allocation13 + $0x60] sm:$0xff]
          %v895 = vld [vmem:[#allocation13 + $0x68] sm:$0xff]
          %v896 = vld [vmem:[#allocation13 + $0x70] sm:$0xff]
          %v897 = vld [vmem:[#allocation13 + $0x78] sm:$0xff]
          %v898 = vld [vmem:[#allocation14] sm:$0x1]
          %v900 = vlaneseq
          %v901 = vshrl.u32 %v900, 7
          %v902 = vsub.s32 0, %v901
          %v903 = vrot.slane %v898, %v902
          %905 = vmatprep.subr.mxu0 0.0
          %906 = vmatpush1.msra.mxu0 %v882
          %907 = vmatprep.subr.mxu0 0.0
          %908 = vmatpush1.msra.mxu0 %v883
          %909 = vmatprep.subr.mxu0 0.0
          %910 = vmatpush1.msra.mxu0 %v884
          %911 = vmatprep.subr.mxu0 0.0
          %912 = vmatpush1.msra.mxu0 %v885
          %913 = vmatprep.subr.mxu0 0.0
          %914 = vmatpush1.msra.mxu0 %v886
          %915 = vmatprep.subr.mxu0 0.0
          %916 = vmatpush1.msra.mxu0 %v887
          %917 = vmatprep.subr.mxu0 0.0
          %918 = vmatpush1.msra.mxu0 %v888
          %919 = vmatprep.subr.mxu0 0.0
          %920 = vmatpush1.msra.mxu0 %v889
          %921 = vmatprep.subr.mxu0 0.0
          %922 = vmatpush1.msra.mxu0 %v890
          %923 = vmatprep.subr.mxu0 0.0
          %924 = vmatpush1.msra.mxu0 %v891
          %925 = vmatprep.subr.mxu0 0.0
          %926 = vmatpush1.msra.mxu0 %v892
          %927 = vmatprep.subr.mxu0 0.0
          %928 = vmatpush1.msra.mxu0 %v893
          %929 = vmatprep.subr.mxu0 0.0
          %930 = vmatpush1.msra.mxu0 %v894
          %931 = vmatprep.subr.mxu0 0.0
          %932 = vmatpush1.msra.mxu0 %v895
          %933 = vmatprep.subr.mxu0 0.0
          %934 = vmatpush1.msra.mxu0 %v896
          %935 = vmatprep.subr.mxu0 0.0
          %936 = vmatpush1.msra.mxu0 %v897
          %937 = vmatprep.subr.mxu0 0.0
          %938 = vmatpush1.msra.mxu0 0.0
          %939 = vmatprep.subr.mxu0 0.0
          %940 = vmatpush1.msra.mxu0 0.0
          %941 = vmatprep.subr.mxu0 0.0
          %942 = vmatpush1.msra.mxu0 0.0
          %943 = vmatprep.subr.mxu0 0.0
          %944 = vmatpush1.msra.mxu0 0.0
          %945 = vmatprep.subr.mxu0 0.0
          %946 = vmatpush1.msra.mxu0 0.0
          %947 = vmatprep.subr.mxu0 0.0
          %948 = vmatpush1.msra.mxu0 0.0
          %949 = vmatprep.subr.mxu0 0.0
          %950 = vmatpush1.msra.mxu0 0.0
          %951 = vmatprep.subr.mxu0 0.0
          %952 = vmatpush1.msra.mxu0 0.0
          %953 = vmatprep.subr.mxu0 0.0
          %954 = vmatpush1.msra.mxu0 0.0
          %955 = vmatprep.subr.mxu0 0.0
          %956 = vmatpush1.msra.mxu0 0.0
          %957 = vmatprep.subr.mxu0 0.0
          %958 = vmatpush1.msra.mxu0 0.0
          %959 = vmatprep.subr.mxu0 0.0
          %960 = vmatpush1.msra.mxu0 0.0
          %961 = vmatprep.subr.mxu0 0.0
          %962 = vmatpush1.msra.mxu0 0.0
          %963 = vmatprep.subr.mxu0 0.0
          %964 = vmatpush1.msra.mxu0 0.0
          %965 = vmatprep.subr.mxu0 0.0
          %966 = vmatpush1.msra.mxu0 0.0
          %967 = vmatprep.subr.mxu0 0.0
          %968 = vmatpush1.msra.mxu0 0.0
          %969 = vmatprep.mubr.f32.mxu0 0.0
          %970 = vmatmul.mubr.f32.gmra.mrb[0].mxu0 %v804
          %v971 = vpop.f32.mrb[0].mxu0
          %v972 = vadd.f32 %v903, %v971
          %v973 = vpop.f32.mrb[0].mxu0
          %974 = vmatprep.mubr.f32.mxu0 0.0
          %975 = vmatmul.mubr.f32.gmra.mrb[0].mxu0 %v809
          %v976 = vpop.f32.mrb[0].mxu0
          %v977 = vadd.f32 %v903, %v976
          %v978 = vpop.f32.mrb[0].mxu0
          %979 = vmatprep.mubr.f32.mxu0 0.0
          %980 = vmatmul.mubr.f32.gmra.mrb[0].mxu0 %v814
          %v981 = vpop.f32.mrb[0].mxu0
          %v982 = vadd.f32 %v903, %v981
          %v983 = vpop.f32.mrb[0].mxu0
          %984 = vmatprep.mubr.f32.mxu0 0.0
          %985 = vmatmul.mubr.f32.gmra.mrb[0].mxu0 %v819
          %v986 = vpop.f32.mrb[0].mxu0
          %v987 = vadd.f32 %v903, %v986
          %v988 = vpop.f32.mrb[0].mxu0
          %989 = vmatprep.mubr.f32.mxu0 0.0
          %990 = vmatmul.mubr.f32.gmra.mrb[0].mxu0 %v824
          %v991 = vpop.f32.mrb[0].mxu0
          %v992 = vadd.f32 %v903, %v991
          %v993 = vpop.f32.mrb[0].mxu0
          %994 = vmatprep.mubr.f32.mxu0 0.0
          %995 = vmatmul.mubr.f32.gmra.mrb[0].mxu0 %v829
          %v996 = vpop.f32.mrb[0].mxu0
          %v997 = vadd.f32 %v903, %v996
          %v998 = vpop.f32.mrb[0].mxu0
          %999 = vmatprep.mubr.f32.mxu0 0.0
          %1000 = vmatmul.mubr.f32.gmra.mrb[0].mxu0 %v834
          %v1001 = vpop.f32.mrb[0].mxu0
          %v1002 = vadd.f32 %v903, %v1001
          %v1003 = vpop.f32.mrb[0].mxu0
          %1004 = vmatprep.mubr.f32.mxu0 0.0
          %1005 = vmatmul.mubr.f32.gmra.mrb[0].mxu0 %v839
          %v1006 = vpop.f32.mrb[0].mxu0
          %v1007 = vadd.f32 %v903, %v1006
          %v1008 = vpop.f32.mrb[0].mxu0
          %1009 = vmatprep.mubr.f32.mxu0 0.0
          %1010 = vmatmul.mubr.f32.gmra.mrb[0].mxu0 %v844
          %v1011 = vpop.f32.mrb[0].mxu0
          %v1012 = vadd.f32 %v903, %v1011
          %v1013 = vpop.f32.mrb[0].mxu0
          %1014 = vmatprep.mubr.f32.mxu0 0.0
          %1015 = vmatmul.mubr.f32.gmra.mrb[0].mxu0 %v849
          %v1016 = vpop.f32.mrb[0].mxu0
          %v1017 = vadd.f32 %v903, %v1016
          %v1018 = vpop.f32.mrb[0].mxu0
          %1019 = vmatprep.mubr.f32.mxu0 0.0
          %1020 = vmatmul.mubr.f32.gmra.mrb[0].mxu0 %v854
          %v1021 = vpop.f32.mrb[0].mxu0
          %v1022 = vadd.f32 %v903, %v1021
          %v1023 = vpop.f32.mrb[0].mxu0
          %1024 = vmatprep.mubr.f32.mxu0 0.0
          %1025 = vmatmul.mubr.f32.gmra.mrb[0].mxu0 %v859
          %v1026 = vpop.f32.mrb[0].mxu0
          %v1027 = vadd.f32 %v903, %v1026
          %v1028 = vpop.f32.mrb[0].mxu0
          %1029 = vmatprep.mubr.f32.mxu0 0.0
          %1030 = vmatmul.mubr.f32.gmra.mrb[0].mxu0 %v864
          %v1031 = vpop.f32.mrb[0].mxu0
          %v1032 = vadd.f32 %v903, %v1031
          %v1033 = vpop.f32.mrb[0].mxu0
          %1034 = vmatprep.mubr.f32.mxu0 0.0
          %1035 = vmatmul.mubr.f32.gmra.mrb[0].mxu0 %v869
          %v1036 = vpop.f32.mrb[0].mxu0
          %v1037 = vadd.f32 %v903, %v1036
          %v1038 = vpop.f32.mrb[0].mxu0
          %1039 = vmatprep.mubr.f32.mxu0 0.0
          %1040 = vmatmul.mubr.f32.gmra.mrb[0].mxu0 %v874
          %v1041 = vpop.f32.mrb[0].mxu0
          %v1042 = vadd.f32 %v903, %v1041
          %v1043 = vpop.f32.mrb[0].mxu0
          %1044 = vmatprep.mubr.f32.mxu0 0.0
          %1045 = vmatmul.mubr.f32.gmra.mrb[0].mxu0 %v879
          %v1046 = vpop.f32.mrb[0].mxu0
          %v1047 = vadd.f32 %v903, %v1046
          %v1048 = vpop.f32.mrb[0].mxu0
          %1049 = vdwg.mxu0
          %1050 = vst [vmem:[%s384] sm:$0xff] %v972
          %1051 = vst [vmem:[%s384 + $0x8] sm:$0xff] %v977
          %1052 = vst [vmem:[%s384 + $0x10] sm:$0xff] %v982
          %1053 = vst [vmem:[%s384 + $0x18] sm:$0xff] %v987
          %1054 = vst [vmem:[%s384 + $0x20] sm:$0xff] %v992
          %1055 = vst [vmem:[%s384 + $0x28] sm:$0xff] %v997
          %1056 = vst [vmem:[%s384 + $0x30] sm:$0xff] %v1002
          %1057 = vst [vmem:[%s384 + $0x38] sm:$0xff] %v1007
          %1058 = vst [vmem:[%s384 + $0x40] sm:$0xff] %v1012
          %1059 = vst [vmem:[%s384 + $0x48] sm:$0xff] %v1017
          %1060 = vst [vmem:[%s384 + $0x50] sm:$0xff] %v1022
          %1061 = vst [vmem:[%s384 + $0x58] sm:$0xff] %v1027
          %1062 = vst [vmem:[%s384 + $0x60] sm:$0xff] %v1032
          %1063 = vst [vmem:[%s384 + $0x68] sm:$0xff] %v1037
          %1064 = vst [vmem:[%s384 + $0x70] sm:$0xff] %v1042
          %1065 = vst [vmem:[%s384 + $0x78] sm:$0xff] %v1047
        $region80: #{gcn_forward.1} parent=43 // pred_fallthru
          _
        %s1066 = sand.u32 %s191, 1
        %s1067 = scalar_lea.sflag [#allocation7], %s1066
        %s1068 = sand.u32 %s191, 1
        %s1069 = smul.addr %s1068, 128
        %s1070 = scalar_lea.vmem [#allocation16], %s1069
        // Predicated region
        $region81: #{gcn_forward.1} parent=43 // pred_check
          %p1071 = pneg %p201
        $region82: #{gcn_forward.1} parent=43 // pred_check_branch
          %1073 = sbr.rel (%p1071) target = $region84
        $region83: #{gcn_forward.1} parent=43 // pred_region
          %s1074 = smul.u32 16, %s37
          %s1076 = ssub.s32 2048, 2048
          %1077 = vsyncadd %s1067, %s1076
          %s1078 = smul.addr %s1074, 128
          %s1079 = scalar_lea.hbm %s7, %s1078
          %s1080 = sshll.u32 %s1070, 4
          %s1081 = int_to_ptr.vmem [resolvable:$true] %s1080
          %1086 = dma.vmem_to_hbm [thread:$0]  %s1081, 2048, %s1079, %s1067, 128, 128, 8
        $region84: #{gcn_forward.1} parent=43 // pred_fallthru
          _
      $region44: #{gcn_forward.1} parent=5 // pred_fallthru
        _
      %p1087 = scmp.le.s32.totalorder 2, %s28
      // Predicated region
      $region85: #{gcn_forward.1} parent=5 // pred_check
        %p1088 = pneg %p1087
      $region86: #{gcn_forward.1} parent=5 // pred_check_branch
        %1090 = sbr.rel (%p1088) target = $region88
      $region87: #{gcn_forward.1} parent=5 // pred_region
        %s1091 = ssub.s32 %s28, 2
        // Predicated region
        $region89: #{gcn_forward.1} parent=87 // pred_check
          %p1092 = pneg %p207
        $region90: #{gcn_forward.1} parent=87 // pred_check_branch
          %1094 = sbr.rel (%p1092) target = $region92
        $region91: #{gcn_forward.1} parent=87 // pred_region
          %s1095 = sand.u32 %s192, 1
          %s1096 = scalar_lea.sflag [#allocation7], %s1095
          %s1097 = sand.u32 %s192, 1
          %s1098 = smul.addr %s1097, 128
          %s1099 = scalar_lea.vmem [#allocation16], %s1098
          %1100 = dma.done %s1096, 2048
        $region92: #{gcn_forward.1} parent=87 // pred_fallthru
          _
      $region88: #{gcn_forward.1} parent=5 // pred_fallthru
        _
    $region6: #{gcn_forward.1} parent=1 // loop_footer
      %s32 = sadd.s32 1, %s28
    $region7: #{gcn_forward.1} parent=1 // loop_footer_branch
      %27 = sbr.rel target = $region3
    $region8: #{gcn_forward.1} parent=1 // loop_exit
      _
    %1101 = vsyncpa [#allocation6], 1
    %s1102 = scalar_lea.sflag [#allocation6], 1
    %1103 = vsyncpa %s1102, 1
    %1104 = vsyncpa [#allocation9], 1
    %s1105 = scalar_lea.sflag [#allocation9], 1
    %1106 = vsyncpa %s1105, 1
    %1107 = vsyncpa [#allocation12], 1
    %1108 = vsyncpa [#allocation15], 1
    %1109 = vsyncpa [#allocation7], 1
    %s1110 = scalar_lea.sflag [#allocation7], 1
    %1111 = vsyncpa %s1110, 1

</llo_original>
